<compile_context>
chip_gen: v7x
topology: tpu7x:2x2x1
jax: 0.10.0
libtpu: 0.0.40
codegen_flags: <defaults>
</compile_context>

<pallas_src>
import functools

import jax
import jax.numpy as jnp
from jax.experimental import pallas as pl
from jax.experimental.pallas import tpu as pltpu

EPS = 1e-5
LANE = 128


def _pad128(n: int) -> int:
    return ((n + LANE - 1) // LANE) * LANE


def _vmem_cap_bytes() -> int:
    try:
        return int(pltpu.get_tpu_info().vmem_capacity_bytes)
    except Exception:
        return 64 << 20            # conservative fallback: v7x per-core VMEM


def _vmem_limit_bytes(need: int, cap: int) -> int:
    # Always explicit (v5e's default scoped limit is only 16 MiB), never more
    # than 75% of the detected per-core capacity (v7x only has 64 MiB).
    return int(min(max(need, 32 << 20), (cap * 3) // 4))


def _choose_batch_tile(batch: int, target: int):
    for t in (target, 1024, 512, 256, 128, 64, 32, 16, 8):
        if t is not None and 8 <= t <= batch and batch % t == 0 and t % 8 == 0:
            return t
    return None


# ---------------------------------------------------------------- fused kernel
def make_fused_kernel(n_enc_hidden: int, n_dec_hidden: int):
    """Single-block fused forward (whole batch resident in VMEM).

    Ref order: x,
      [enc hidden: W bf16 [in, out_p], packed f32 [3, out_p] (bias,gamma,beta)]*k,
      enc final W, bias [1, out_p],
      [dec hidden: W, packed [3, out_p]]*k,
      dec final W, bias [1, out_p],
      out [B, feat_p].
    """

    def kernel(*refs):
        x_ref = refs[0]
        out_ref = refs[-1]
        p = refs[1:-1]

        def linear(h, w_ref, b):
            # bf16 MXU matmul with f32 accumulation; bias add in f32.
            return jnp.dot(h.astype(jnp.bfloat16), w_ref[...],
                           preferred_element_type=jnp.float32) + b

        def bn_relu(h, g, be):
            # BatchNorm1d training mode: biased batch stats, all in f32.
            mu = jnp.mean(h, axis=0, keepdims=True)
            d = h - mu
            var = jnp.mean(d * d, axis=0, keepdims=True)
            return jnp.maximum(d * jax.lax.rsqrt(var + EPS) * g + be, 0.0)

        h = x_ref[...].astype(jnp.float32)
        idx = 0
        for _ in range(n_enc_hidden):
            vec = p[idx + 1][...]                  # rows: bias, gamma, beta
            h = linear(h, p[idx], vec[0:1, :])
            h = bn_relu(h, vec[1:2, :], vec[2:3, :])
            idx += 2
        h = linear(h, p[idx], p[idx + 1][...])     # encoder final (code)
        idx += 2
        for _ in range(n_dec_hidden):
            vec = p[idx + 1][...]
            h = linear(h, p[idx], vec[0:1, :])
            h = bn_relu(h, vec[1:2, :], vec[2:3, :])
            idx += 2
        h = linear(h, p[idx], p[idx + 1][...])     # decoder final
        out_ref[...] = jnp.tanh(h)

    return kernel


# ---------------------------------------------------------------- tiled kernels
def make_pass_kernel(prev_has_bn: bool, has_bn: bool, is_last: bool, inv_batch: float):
    """One batch-tiled pass: apply previous layer's BN+ReLU (with full-batch
    stats), then this layer's Linear (+tanh if last), and accumulate this
    layer's column sum / sum-of-squares if it feeds a BatchNorm."""

    def kernel(*refs):
        if prev_has_bn:
            a_ref, pstats_ref, pvec_ref, w_ref, bvec_ref = refs[:5]
            outs = refs[5:]
        else:
            a_ref, w_ref, bvec_ref = refs[:3]
            outs = refs[3:]
        z_ref = outs[0]

        a = a_ref[...]
        if prev_has_bn:
            s = pstats_ref[...]                              # [2, in_p] f32
            mean = s[0:1, :] * inv_batch
            var = jnp.maximum(s[1:2, :] * inv_batch - mean * mean, 0.0)
            a = jnp.maximum((a - mean) * jax.lax.rsqrt(var + EPS)
                            * pvec_ref[1:2, :] + pvec_ref[2:3, :], 0.0)

        z = jnp.dot(a.astype(jnp.bfloat16), w_ref[...],
                    preferred_element_type=jnp.float32) + bvec_ref[0:1, :]
        if is_last:
            z = jnp.tanh(z)
        z_ref[...] = z

        if has_bn:
            stats_ref = outs[1]

            @pl.when(pl.program_id(0) == 0)
            def _():
                stats_ref[...] = jnp.zeros_like(stats_ref)

            stats_ref[...] += jnp.concatenate(
                [jnp.sum(z, axis=0, keepdims=True),
                 jnp.sum(z * z, axis=0, keepdims=True)], axis=0)

    return kernel


def _tiled_pass(a, prev_stats, prev_vec, w, bvec,
                prev_has_bn, has_bn, is_last, tb, batch, cap):
    n_tiles = batch // tb
    in_dim = a.shape[1]
    out_p = w.shape[1]
    kernel = make_pass_kernel(prev_has_bn, has_bn, is_last, 1.0 / batch)

    in_specs = [pl.BlockSpec((tb, in_dim), lambda i: (i, 0))]
    inputs = [a]
    if prev_has_bn:
        in_specs += [pl.BlockSpec((2, in_dim), lambda i: (0, 0)),
                     pl.BlockSpec(prev_vec.shape, lambda i: (0, 0))]
        inputs += [prev_stats, prev_vec]
    in_specs += [pl.BlockSpec((in_dim, out_p), lambda i: (0, 0)),
                 pl.BlockSpec(bvec.shape, lambda i: (0, 0))]
    inputs += [w, bvec]

    z_spec = pl.BlockSpec((tb, out_p), lambda i: (i, 0))
    z_shape = jax.ShapeDtypeStruct((batch, out_p), jnp.float32)
    if has_bn:
        out_specs = (z_spec, pl.BlockSpec((2, out_p), lambda i: (0, 0)))
        out_shape = (z_shape, jax.ShapeDtypeStruct((2, out_p), jnp.float32))
        sem = ("arbitrary",)       # stats output block is revisited every step
    else:
        out_specs = z_spec
        out_shape = z_shape
        sem = ("parallel",)        # megacore-shardable on v7x

    # Per-step live set: double-buffered activation tiles + (resident) weights.
    need = 2 * tb * in_dim * 4 + 2 * tb * out_p * 4 \
        + 2 * int(w.size) * w.dtype.itemsize + (2 << 20)

    res = pl.pallas_call(
        kernel,
        grid=(n_tiles,),
        in_specs=in_specs,
        out_specs=out_specs,
        out_shape=out_shape,
        compiler_params=pltpu.CompilerParams(
            dimension_semantics=sem,
            vmem_limit_bytes=_vmem_limit_bytes(need, cap)),
    )(*inputs)
    if has_bn:
        return res[0], res[1]
    return res, None


# ---------------------------------------------------------------- parameters
def init_params(nodes, key):
    """Deterministic init mimicking PyTorch Linear defaults (unpadded, f32,
    PyTorch layer order). Weights are stored already transposed: [in, out]."""
    params = []

    def linear_params(k, fan_in, fan_out):
        kw, kb = jax.random.split(k)
        bound = 1.0 / float(fan_in) ** 0.5
        w = jax.random.uniform(kw, (fan_in, fan_out), jnp.float32, -bound, bound)
        b = jax.random.uniform(kb, (1, fan_out), jnp.float32, -bound, bound)
        return w, b

    for i in range(1, len(nodes) - 1):                       # encoder hidden
        key, sub = jax.random.split(key)
        w, b = linear_params(sub, nodes[i - 1], nodes[i])
        params += [w, b, jnp.ones((1, nodes[i]), jnp.float32),
                   jnp.zeros((1, nodes[i]), jnp.float32)]
    key, sub = jax.random.split(key)                          # encoder final
    w, b = linear_params(sub, nodes[-2], nodes[-1])
    params += [w, b]
    for i in reversed(range(2, len(nodes))):                  # decoder hidden
        key, sub = jax.random.split(key)
        w, b = linear_params(sub, nodes[i], nodes[i - 1])
        params += [w, b, jnp.ones((1, nodes[i - 1]), jnp.float32),
                   jnp.zeros((1, nodes[i - 1]), jnp.float32)]
    key, sub = jax.random.split(key)                          # decoder final
    w, b = linear_params(sub, nodes[1], nodes[0])
    params += [w, b]
    return params


def prepare_params(params, nodes):
    """ONE-TIME padding/packing (hoisted out of the per-call / jit path):
      * weights -> bf16, output dim zero-padded to a multiple of 128; input dim
        padded too EXCEPT the first encoder weight (the kernel dots x directly
        at K = nodes[0], so x never needs padding);
      * each hidden layer's (bias, gamma, beta) packed into one f32 [3, out_p];
        final linears keep a f32 [1, out_p] bias.
    Zero padding keeps padded columns identically zero through every layer."""
    n_hidden = len(nodes) - 2
    ops = []
    idx = 0

    def pad_w(w, pad_in):
        ip = _pad128(w.shape[0]) if pad_in else w.shape[0]
        op = _pad128(w.shape[1])
        w = jnp.pad(w, ((0, ip - w.shape[0]), (0, op - w.shape[1])))
        return w.astype(jnp.bfloat16)

    def pad_v(v):
        op = _pad128(v.shape[1])
        return jnp.pad(v, ((0, 0), (0, op - v.shape[1]))).astype(jnp.float32)

    first = True
    for _ in range(n_hidden):                                 # encoder hidden
        w, b, g, be = params[idx:idx + 4]; idx += 4
        ops += [pad_w(w, pad_in=not first),
                pad_v(jnp.concatenate([b, g, be], axis=0))]
        first = False
    w, b = params[idx:idx + 2]; idx += 2                      # encoder final
    ops += [pad_w(w, pad_in=not first), pad_v(b)]
    first = False
    for _ in range(n_hidden):                                 # decoder hidden
        w, b, g, be = params[idx:idx + 4]; idx += 4
        ops += [pad_w(w, pad_in=True),
                pad_v(jnp.concatenate([b, g, be], axis=0))]
    w, b = params[idx:idx + 2]; idx += 2                      # decoder final
    ops += [pad_w(w, pad_in=True), pad_v(b)]
    return tuple(jax.device_put(o) for o in ops)


# ---------------------------------------------------------------- forward paths
def _fused_forward(x, packed, nodes, need_bytes, cap):
    n_hidden = len(nodes) - 2
    batch, feat = x.shape
    feat_p = _pad128(feat)

    kernel = make_fused_kernel(n_hidden, n_hidden)
    out_shape = jax.ShapeDtypeStruct((batch, feat_p), jnp.float32)

    weights = packed[0::2]
    flops = 2 * batch * sum(int(w.shape[0]) * int(w.shape[1]) for w in weights)
    transcendentals = batch * feat_p + 2 * n_hidden * max(_pad128(n) for n in nodes)
    bytes_accessed = (batch * feat * 4
                      + sum(int(o.size) * o.dtype.itemsize for o in packed)
                      + batch * feat_p * 4)

    return pl.pallas_call(
        kernel,
        out_shape=out_shape,
        compiler_params=pltpu.CompilerParams(
            vmem_limit_bytes=_vmem_limit_bytes(need_bytes, cap)),
        cost_estimate=pl.CostEstimate(
            flops=flops, transcendentals=transcendentals,
            bytes_accessed=bytes_accessed),
    )(x, *packed)


def _tiled_forward(x, packed, nodes, tb, cap):
    n_hidden = len(nodes) - 2
    batch = x.shape[0]

    # (weight, packed-vector, feeds-a-BatchNorm) per linear layer, forward order.
    layers = []
    idx = 0
    for _ in range(n_hidden):
        layers.append((packed[idx], packed[idx + 1], True)); idx += 2
    layers.append((packed[idx], packed[idx + 1], False)); idx += 2
    for _ in range(n_hidden):
        layers.append((packed[idx], packed[idx + 1], True)); idx += 2
    layers.append((packed[idx], packed[idx + 1], False)); idx += 2

    h = x.astype(jnp.float32)
    prev_stats, prev_vec, prev_has_bn = None, None, False
    for li, (w, bvec, has_bn) in enumerate(layers):
        is_last = li == len(layers) - 1
        h, stats = _tiled_pass(h, prev_stats, prev_vec, w, bvec,
                               prev_has_bn, has_bn, is_last, tb, batch, cap)
        prev_stats, prev_vec, prev_has_bn = stats, bvec, has_bn
    return h


@functools.partial(jax.jit, static_argnames=("nodes", "tiled", "batch_tile"))
def autoencoder_forward(x, packed, nodes, tiled=None, batch_tile=256):
    """Forward pass. `packed` must come from prepare_params() (done once)."""
    packed = tuple(packed)
    batch, feat = x.shape
    feat_p = _pad128(feat)
    max_wp = max(_pad128(n) for n in nodes)
    cap = _vmem_cap_bytes()

    # Actual live set of the fused single-block path: x + params + out + a few
    # live activation slabs (h f32, bf16 copy, matmul result, BN temporaries).
    param_bytes = sum(int(o.size) * o.dtype.itemsize for o in packed)
    single_need = (batch * feat * 4 + param_bytes + batch * feat_p * 4
                   + 6 * batch * max_wp * 4)
    single_need = int(single_need * 1.5) + (2 << 20)

    tb = _choose_batch_tile(batch, batch_tile)
    if tiled is None:
        tiled = (tb is not None) and single_need > int(cap * 0.6)
    if tiled and tb is None:
        tiled = False                    # batch not cleanly tileable -> fused

    if tiled:
        out_p = _tiled_forward(x, packed, nodes, tb, cap)
    else:
        out_p = _fused_forward(x, packed, nodes, single_need, cap)
    # Lane-dense padded store inside the kernel; trim here (consumers that can
    # handle the padded slab may skip this slice).
    return out_p[:, :feat]


# ---------------------------------------------------------------- references
def _reference(x, params, nodes, bf16_matmul):
    n_hidden = len(nodes) - 2
    h = x.astype(jnp.float32)
    idx = 0

    def lin(h, w, b):
        if bf16_matmul:
            return jnp.dot(h.astype(jnp.bfloat16), w.astype(jnp.bfloat16),
                           preferred_element_type=jnp.float32) + b
        return jnp.dot(h, w, precision=jax.lax.Precision.HIGHEST) + b

    def bn_relu(h, g, be):
        mu = jnp.mean(h, axis=0, keepdims=True)
        d = h - mu
        var = jnp.mean(d * d, axis=0, keepdims=True)
        return jnp.maximum(d * jax.lax.rsqrt(var + EPS) * g + be, 0.0)

    for _ in range(n_hidden):
        h = lin(h, params[idx], params[idx + 1])
        h = bn_relu(h, params[idx + 2], params[idx + 3])
        idx += 4
    h = lin(h, params[idx], params[idx + 1]); idx += 2
    for _ in range(n_hidden):
        h = lin(h, params[idx], params[idx + 1])
        h = bn_relu(h, params[idx + 2], params[idx + 3])
        idx += 4
    h = lin(h, params[idx], params[idx + 1])
    return jnp.tanh(h)


def reference_forward_bf16(x, params, nodes):
    return _reference(x, params, nodes, bf16_matmul=True)


def reference_forward_f32(x, params, nodes):
    return _reference(x, params, nodes, bf16_matmul=False)


# TODO(synk): fit() (DataLoader / Adam / MSELoss training loop) is host-side
# training logic, not a kernel, and is intentionally not translated.

if __name__ == "__main__":
    nodes = (64, 32, 16)   # autoencoder([64, 32, 16]): 64 -> 32 -> 16 -> 32 -> 64

    key = jax.random.PRNGKey(0)
    kx, kp, kx2 = jax.random.split(key, 3)
    params = init_params(nodes, kp)
    packed = prepare_params(params, nodes)   # one-time padding/packing (hoisted)

    # --- small batch: fully fused single-block path ---
    x = jax.random.normal(kx, (128, nodes[0]), jnp.float32)
    out = jax.block_until_ready(autoencoder_forward(x, packed, nodes))
    assert out.shape == (128, nodes[0])
    ref_bf16 = reference_forward_bf16(x, params, nodes)
    assert jnp.allclose(out, ref_bf16, atol=5e-3, rtol=5e-3), \
        "fused kernel mismatch vs bf16-matmul reference"
    ref_f32 = reference_forward_f32(x, params, nodes)
    assert float(jnp.max(jnp.abs(out - ref_f32))) < 5e-2, \
        "fused kernel drifted from f32 reference"

    # --- larger batch: batch-tiled two-phase-BatchNorm path ---
    xb = jax.random.normal(kx2, (1024, nodes[0]), jnp.float32)
    outb = jax.block_until_ready(
        autoencoder_forward(xb, packed, nodes, tiled=True, batch_tile=256))
    assert outb.shape == (1024, nodes[0])
    refb_bf16 = reference_forward_bf16(xb, params, nodes)
    assert jnp.allclose(outb, refb_bf16, atol=5e-3, rtol=5e-3), \
        "tiled kernel mismatch vs bf16-matmul reference"
    refb_f32 = reference_forward_f32(xb, params, nodes)
    assert float(jnp.max(jnp.abs(outb - refb_f32))) < 5e-2, \
        "tiled kernel drifted from f32 reference"

    print("KERNEL_OK")
</pallas_src>

<mosaic_0001>
module attributes {stable_mosaic.version = 11 : i64} {
  func.func @kernel(%arg0: memref<128x64xf32, #tpu.memory_space<vmem>>, %arg1: memref<64x128xbf16, #tpu.memory_space<vmem>>, %arg2: memref<3x128xf32, #tpu.memory_space<vmem>>, %arg3: memref<128x128xbf16, #tpu.memory_space<vmem>>, %arg4: memref<1x128xf32, #tpu.memory_space<vmem>>, %arg5: memref<128x128xbf16, #tpu.memory_space<vmem>>, %arg6: memref<3x128xf32, #tpu.memory_space<vmem>>, %arg7: memref<128x128xbf16, #tpu.memory_space<vmem>>, %arg8: memref<1x128xf32, #tpu.memory_space<vmem>>, %arg9: memref<128x128xf32, #tpu.memory_space<vmem>>) attributes {dimension_semantics = [], scalar_prefetch = 0 : i64, scratch_operands = 0 : i64, tpu.core_type = #tpu.core_type<tc>} {
    %c0 = arith.constant 0 : index
    %c0_0 = arith.constant 0 : index
    %0 = vector.load %arg0[%c0, %c0_0] : memref<128x64xf32, #tpu.memory_space<vmem>>, vector<128x64xf32>
    %c0_1 = arith.constant 0 : index
    %c0_2 = arith.constant 0 : index
    %1 = vector.load %arg2[%c0_1, %c0_2] : memref<3x128xf32, #tpu.memory_space<vmem>>, vector<3x128xf32>
    %2 = vector.extract_strided_slice %1 {offsets = [0, 0], sizes = [1, 128], strides = [1, 1]} : vector<3x128xf32> to vector<1x128xf32>
    %3 = arith.truncf %0 : vector<128x64xf32> to vector<128x64xbf16>
    %c0_3 = arith.constant 0 : index
    %c0_4 = arith.constant 0 : index
    %4 = vector.load %arg1[%c0_3, %c0_4] : memref<64x128xbf16, #tpu.memory_space<vmem>>, vector<64x128xbf16>
    %cst = arith.constant dense<0.000000e+00> : vector<128x128xf32>
    %5 = tpu.matmul %3, %4, %cst {dimension_numbers = #tpu.dot_dimension_numbers<[1], [0], [0], [1], [0, 0, 1, 1], [], []>} : vector<128x64xbf16>, vector<64x128xbf16>, vector<128x128xf32> -> vector<128x128xf32>
    %6 = vector.broadcast %2 : vector<1x128xf32> to vector<128x128xf32>
    %7 = arith.addf %5, %6 : vector<128x128xf32>
    %8 = vector.extract_strided_slice %1 {offsets = [1, 0], sizes = [1, 128], strides = [1, 1]} : vector<3x128xf32> to vector<1x128xf32>
    %9 = vector.extract_strided_slice %1 {offsets = [2, 0], sizes = [1, 128], strides = [1, 1]} : vector<3x128xf32> to vector<1x128xf32>
    %cst_5 = arith.constant dense<0.000000e+00> : vector<128xf32>
    %10 = vector.multi_reduction <add>, %7, %cst_5 [0] : vector<128x128xf32> to vector<128xf32>
    %11 = vector.shape_cast %10 : vector<128xf32> to vector<1x128xf32>
    %cst_6 = arith.constant 1.280000e+02 : f32
    %12 = vector.broadcast %cst_6 : f32 to vector<1x128xf32>
    %13 = arith.divf %11, %12 : vector<1x128xf32>
    %14 = vector.broadcast %13 : vector<1x128xf32> to vector<128x128xf32>
    %15 = arith.subf %7, %14 : vector<128x128xf32>
    %16 = arith.mulf %15, %15 : vector<128x128xf32>
    %cst_7 = arith.constant dense<0.000000e+00> : vector<128xf32>
    %17 = vector.multi_reduction <add>, %16, %cst_7 [0] : vector<128x128xf32> to vector<128xf32>
    %18 = vector.shape_cast %17 : vector<128xf32> to vector<1x128xf32>
    %cst_8 = arith.constant 1.280000e+02 : f32
    %19 = vector.broadcast %cst_8 : f32 to vector<1x128xf32>
    %20 = arith.divf %18, %19 : vector<1x128xf32>
    %cst_9 = arith.constant 9.99999974E-6 : f32
    %21 = vector.broadcast %cst_9 : f32 to vector<1x128xf32>
    %22 = arith.addf %20, %21 : vector<1x128xf32>
    %23 = math.rsqrt %22 : vector<1x128xf32>
    %24 = vector.broadcast %23 : vector<1x128xf32> to vector<128x128xf32>
    %25 = arith.mulf %15, %24 : vector<128x128xf32>
    %26 = vector.broadcast %8 : vector<1x128xf32> to vector<128x128xf32>
    %27 = arith.mulf %25, %26 : vector<128x128xf32>
    %28 = vector.broadcast %9 : vector<1x128xf32> to vector<128x128xf32>
    %29 = arith.addf %27, %28 : vector<128x128xf32>
    %cst_10 = arith.constant 0.000000e+00 : f32
    %30 = vector.broadcast %cst_10 : f32 to vector<128x128xf32>
    %31 = arith.maximumf %29, %30 : vector<128x128xf32>
    %c0_11 = arith.constant 0 : index
    %c0_12 = arith.constant 0 : index
    %32 = vector.load %arg4[%c0_11, %c0_12] : memref<1x128xf32, #tpu.memory_space<vmem>>, vector<1x128xf32>
    %33 = arith.truncf %31 : vector<128x128xf32> to vector<128x128xbf16>
    %c0_13 = arith.constant 0 : index
    %c0_14 = arith.constant 0 : index
    %34 = vector.load %arg3[%c0_13, %c0_14] : memref<128x128xbf16, #tpu.memory_space<vmem>>, vector<128x128xbf16>
    %cst_15 = arith.constant dense<0.000000e+00> : vector<128x128xf32>
    %35 = tpu.matmul %33, %34, %cst_15 {dimension_numbers = #tpu.dot_dimension_numbers<[1], [0], [0], [1], [0, 0, 1, 1], [], []>} : vector<128x128xbf16>, vector<128x128xbf16>, vector<128x128xf32> -> vector<128x128xf32>
    %36 = vector.broadcast %32 : vector<1x128xf32> to vector<128x128xf32>
    %37 = arith.addf %35, %36 : vector<128x128xf32>
    %c0_16 = arith.constant 0 : index
    %c0_17 = arith.constant 0 : index
    %38 = vector.load %arg6[%c0_16, %c0_17] : memref<3x128xf32, #tpu.memory_space<vmem>>, vector<3x128xf32>
    %39 = vector.extract_strided_slice %38 {offsets = [0, 0], sizes = [1, 128], strides = [1, 1]} : vector<3x128xf32> to vector<1x128xf32>
    %40 = arith.truncf %37 : vector<128x128xf32> to vector<128x128xbf16>
    %c0_18 = arith.constant 0 : index
    %c0_19 = arith.constant 0 : index
    %41 = vector.load %arg5[%c0_18, %c0_19] : memref<128x128xbf16, #tpu.memory_space<vmem>>, vector<128x128xbf16>
    %cst_20 = arith.constant dense<0.000000e+00> : vector<128x128xf32>
    %42 = tpu.matmul %40, %41, %cst_20 {dimension_numbers = #tpu.dot_dimension_numbers<[1], [0], [0], [1], [0, 0, 1, 1], [], []>} : vector<128x128xbf16>, vector<128x128xbf16>, vector<128x128xf32> -> vector<128x128xf32>
    %43 = vector.broadcast %39 : vector<1x128xf32> to vector<128x128xf32>
    %44 = arith.addf %42, %43 : vector<128x128xf32>
    %45 = vector.extract_strided_slice %38 {offsets = [1, 0], sizes = [1, 128], strides = [1, 1]} : vector<3x128xf32> to vector<1x128xf32>
    %46 = vector.extract_strided_slice %38 {offsets = [2, 0], sizes = [1, 128], strides = [1, 1]} : vector<3x128xf32> to vector<1x128xf32>
    %cst_21 = arith.constant dense<0.000000e+00> : vector<128xf32>
    %47 = vector.multi_reduction <add>, %44, %cst_21 [0] : vector<128x128xf32> to vector<128xf32>
    %48 = vector.shape_cast %47 : vector<128xf32> to vector<1x128xf32>
    %cst_22 = arith.constant 1.280000e+02 : f32
    %49 = vector.broadcast %cst_22 : f32 to vector<1x128xf32>
    %50 = arith.divf %48, %49 : vector<1x128xf32>
    %51 = vector.broadcast %50 : vector<1x128xf32> to vector<128x128xf32>
    %52 = arith.subf %44, %51 : vector<128x128xf32>
    %53 = arith.mulf %52, %52 : vector<128x128xf32>
    %cst_23 = arith.constant dense<0.000000e+00> : vector<128xf32>
    %54 = vector.multi_reduction <add>, %53, %cst_23 [0] : vector<128x128xf32> to vector<128xf32>
    %55 = vector.shape_cast %54 : vector<128xf32> to vector<1x128xf32>
    %cst_24 = arith.constant 1.280000e+02 : f32
    %56 = vector.broadcast %cst_24 : f32 to vector<1x128xf32>
    %57 = arith.divf %55, %56 : vector<1x128xf32>
    %cst_25 = arith.constant 9.99999974E-6 : f32
    %58 = vector.broadcast %cst_25 : f32 to vector<1x128xf32>
    %59 = arith.addf %57, %58 : vector<1x128xf32>
    %60 = math.rsqrt %59 : vector<1x128xf32>
    %61 = vector.broadcast %60 : vector<1x128xf32> to vector<128x128xf32>
    %62 = arith.mulf %52, %61 : vector<128x128xf32>
    %63 = vector.broadcast %45 : vector<1x128xf32> to vector<128x128xf32>
    %64 = arith.mulf %62, %63 : vector<128x128xf32>
    %65 = vector.broadcast %46 : vector<1x128xf32> to vector<128x128xf32>
    %66 = arith.addf %64, %65 : vector<128x128xf32>
    %cst_26 = arith.constant 0.000000e+00 : f32
    %67 = vector.broadcast %cst_26 : f32 to vector<128x128xf32>
    %68 = arith.maximumf %66, %67 : vector<128x128xf32>
    %c0_27 = arith.constant 0 : index
    %c0_28 = arith.constant 0 : index
    %69 = vector.load %arg8[%c0_27, %c0_28] : memref<1x128xf32, #tpu.memory_space<vmem>>, vector<1x128xf32>
    %70 = arith.truncf %68 : vector<128x128xf32> to vector<128x128xbf16>
    %c0_29 = arith.constant 0 : index
    %c0_30 = arith.constant 0 : index
    %71 = vector.load %arg7[%c0_29, %c0_30] : memref<128x128xbf16, #tpu.memory_space<vmem>>, vector<128x128xbf16>
    %cst_31 = arith.constant dense<0.000000e+00> : vector<128x128xf32>
    %72 = tpu.matmul %70, %71, %cst_31 {dimension_numbers = #tpu.dot_dimension_numbers<[1], [0], [0], [1], [0, 0, 1, 1], [], []>} : vector<128x128xbf16>, vector<128x128xbf16>, vector<128x128xf32> -> vector<128x128xf32>
    %73 = vector.broadcast %69 : vector<1x128xf32> to vector<128x128xf32>
    %74 = arith.addf %72, %73 : vector<128x128xf32>
    %75 = math.tanh %74 : vector<128x128xf32>
    %c0_32 = arith.constant 0 : index
    %c0_33 = arith.constant 0 : index
    %76 = vector.load %arg9[%c0_32, %c0_33] : memref<128x128xf32, #tpu.memory_space<vmem>>, vector<128x128xf32>
    tpu.vector_store %arg9[%c0_32, %c0_33], %75 {strides = array<i32>} : memref<128x128xf32, #tpu.memory_space<vmem>>, vector<128x128xf32>,
    return
  }
}

</mosaic_0001>

<llo_original>
// kernel: autoencoder_forward.1
$region0: #{autoencoder_forward.1}
  #allocation0 [shape = 'u32[]', space=smem, size = 0x4, offset = 0x4, fixed_abs, tag = 'smem constant byte address 0x4 - core index']
  #allocation1 [shape = 'u32[144,128]{1,0:T(1,128)}', space=vmem, size = 0x12000, scoped, tag = 'internal scratch']
  %s0 = inlined_call_operand.vmem [shape: f32[128,64], index: 0, kind: input, shape index: {}]
  %s1 = inlined_call_operand.hbm [shape: bf16[64,128], index: 1, kind: input, shape index: {}]
  %s2 = inlined_call_operand.vmem [shape: f32[3,128], index: 2, kind: input, shape index: {}]
  %s3 = inlined_call_operand.vmem [shape: bf16[128,128], index: 3, kind: input, shape index: {}]
  %s4 = inlined_call_operand.vmem [shape: f32[1,128], index: 4, kind: input, shape index: {}]
  %s5 = inlined_call_operand.vmem [shape: bf16[128,128], index: 5, kind: input, shape index: {}]
  %s6 = inlined_call_operand.vmem [shape: f32[3,128], index: 6, kind: input, shape index: {}]
  %s7 = inlined_call_operand.vmem [shape: bf16[128,128], index: 7, kind: input, shape index: {}]
  %s8 = inlined_call_operand.vmem [shape: f32[1,128], index: 8, kind: input, shape index: {}]
  %s9 = inlined_call_operand.vmem [shape: f32[128,128], index: 9, kind: output, shape index: {}]
  %s10 = sld [smem:[#allocation0]]
  $region50: #{autoencoder_forward.1} parent=0
    _
  %s12 = ssub.s32 1, %s10
  %s13 = scalar_select 0, %s12, %s10
  $region1: #{autoencoder_forward.1} parent=0
    #allocation2 [shape = 'u8[16384]{0}', space=vmem, size = 0x4000, scoped, tag = 'input window, operand 1, single buffered']
    #allocation3 [shape = 's32[1]{0}', space=sflag, size = 0x4, scoped, tag = 'scoped memory for autoencoder_forward.1']
    %14 = vsyncpa [#allocation3], 0
    // Predicated region
    $region2: #{autoencoder_forward.1} parent=1 // pred_check
      _
    $region3: #{autoencoder_forward.1} parent=1 // pred_check_branch
      %16 = sbr.rel (0) target = $region5
    $region4: #{autoencoder_forward.1} parent=1 // pred_region
      _
    $region5: #{autoencoder_forward.1} parent=1 // pred_fallthru
      _
    // Predicated region
    $region6: #{autoencoder_forward.1} parent=1 // pred_check
      _
    $region7: #{autoencoder_forward.1} parent=1 // pred_check_branch
      %18 = sbr.rel (0) target = $region9
    $region8: #{autoencoder_forward.1} parent=1 // pred_region
      %s20 = ssub.s32 512, 512
      %21 = vsyncadd [#allocation3], %s20
      %s22 = sshll.u32 [#allocation2], 4
      %s23 = int_to_ptr.vmem [resolvable:$true] %s22
      %28 = dma.hbm_to_vmem [thread:$0]  %s1, 512, %s23, [#allocation3], 64, 64, 4
    $region9: #{autoencoder_forward.1} parent=1 // pred_fallthru
      _
    // Predicated region
    $region10: #{autoencoder_forward.1} parent=1 // pred_check
      _
    $region11: #{autoencoder_forward.1} parent=1 // pred_check_branch
      %30 = sbr.rel (0) target = $region13
    $region12: #{autoencoder_forward.1} parent=1 // pred_region
      _
    $region13: #{autoencoder_forward.1} parent=1 // pred_fallthru
      _
    // Predicated region
    $region14: #{autoencoder_forward.1} parent=1 // pred_check
      _
    $region15: #{autoencoder_forward.1} parent=1 // pred_check_branch
      %32 = sbr.rel (0) target = $region17
    $region16: #{autoencoder_forward.1} parent=1 // pred_region
      _
    $region17: #{autoencoder_forward.1} parent=1 // pred_fallthru
      _
    // Predicated region
    $region18: #{autoencoder_forward.1} parent=1 // pred_check
      _
    $region19: #{autoencoder_forward.1} parent=1 // pred_check_branch
      %34 = sbr.rel (0) target = $region21
    $region20: #{autoencoder_forward.1} parent=1 // pred_region
      _
    $region21: #{autoencoder_forward.1} parent=1 // pred_fallthru
      _
    // Predicated region
    $region22: #{autoencoder_forward.1} parent=1 // pred_check
      _
    $region23: #{autoencoder_forward.1} parent=1 // pred_check_branch
      %36 = sbr.rel (0) target = $region25
    $region24: #{autoencoder_forward.1} parent=1 // pred_region
      _
    $region25: #{autoencoder_forward.1} parent=1 // pred_fallthru
      _
    // Predicated region
    $region26: #{autoencoder_forward.1} parent=1 // pred_check
      _
    $region27: #{autoencoder_forward.1} parent=1 // pred_check_branch
      %38 = sbr.rel (0) target = $region29
    $region28: #{autoencoder_forward.1} parent=1 // pred_region
      _
    $region29: #{autoencoder_forward.1} parent=1 // pred_fallthru
      _
    // Predicated region
    $region30: #{autoencoder_forward.1} parent=1 // pred_check
      _
    $region31: #{autoencoder_forward.1} parent=1 // pred_check_branch
      %40 = sbr.rel (0) target = $region33
    $region32: #{autoencoder_forward.1} parent=1 // pred_region
      _
    $region33: #{autoencoder_forward.1} parent=1 // pred_fallthru
      _
    // Predicated region
    $region34: #{autoencoder_forward.1} parent=1 // pred_check
      _
    $region35: #{autoencoder_forward.1} parent=1 // pred_check_branch
      %42 = sbr.rel (0) target = $region37
    $region36: #{autoencoder_forward.1} parent=1 // pred_region
      _
    $region37: #{autoencoder_forward.1} parent=1 // pred_fallthru
      _
    // Predicated region
    $region38: #{autoencoder_forward.1} parent=1 // pred_check
      _
    $region39: #{autoencoder_forward.1} parent=1 // pred_check_branch
      %44 = sbr.rel (0) target = $region41
    $region40: #{autoencoder_forward.1} parent=1 // pred_region
      %45 = dma.done [#allocation3], 512
    $region41: #{autoencoder_forward.1} parent=1 // pred_fallthru
      _
    %v47 = vld [vmem:[%s0] sm:$0xff]
    %v48 = vld [vmem:[%s0 + $0x8] sm:$0xff]
    %v49 = vld [vmem:[%s0 + $0x10] sm:$0xff]
    %v50 = vld [vmem:[%s0 + $0x18] sm:$0xff]
    %v51 = vld [vmem:[%s0 + $0x20] sm:$0xff]
    %v52 = vld [vmem:[%s0 + $0x28] sm:$0xff]
    %v53 = vld [vmem:[%s0 + $0x30] sm:$0xff]
    %v54 = vld [vmem:[%s0 + $0x38] sm:$0xff]
    %v55 = vld [vmem:[%s0 + $0x40] sm:$0xff]
    %v56 = vld [vmem:[%s0 + $0x48] sm:$0xff]
    %v57 = vld [vmem:[%s0 + $0x50] sm:$0xff]
    %v58 = vld [vmem:[%s0 + $0x58] sm:$0xff]
    %v59 = vld [vmem:[%s0 + $0x60] sm:$0xff]
    %v60 = vld [vmem:[%s0 + $0x68] sm:$0xff]
    %v61 = vld [vmem:[%s0 + $0x70] sm:$0xff]
    %v62 = vld [vmem:[%s0 + $0x78] sm:$0xff]
    %v63 = vld [vmem:[%s2] sm:$0x7]
    %v64 = vpack.c.bf16 %v48, %v47
    %v65 = vpack.c.bf16 %v50, %v49
    %v66 = vpack.c.bf16 %v52, %v51
    %v67 = vpack.c.bf16 %v54, %v53
    %v68 = vpack.c.bf16 %v56, %v55
    %v69 = vpack.c.bf16 %v58, %v57
    %v70 = vpack.c.bf16 %v60, %v59
    %v71 = vpack.c.bf16 %v62, %v61
    %v72 = vld [vmem:[#allocation2] sm:$0xf]
    %v73 = vld [vmem:[#allocation2 + $0x4] sm:$0xf]
    %v74 = vld [vmem:[#allocation2 + $0x8] sm:$0xf]
    %v75 = vld [vmem:[#allocation2 + $0xc] sm:$0xf]
    %v76 = vld [vmem:[#allocation2 + $0x10] sm:$0xf]
    %v77 = vld [vmem:[#allocation2 + $0x14] sm:$0xf]
    %v78 = vld [vmem:[#allocation2 + $0x18] sm:$0xf]
    %v79 = vld [vmem:[#allocation2 + $0x1c] sm:$0xf]
    %v80 = vlaneseq
    %v81 = vshrl.u32 %v80, 7
    %v82 = vsub.s32 0, %v81
    %v83 = vrot.slane %v63, %v82
    %v92 = vunpack.c.l.b16 %v72
    %v93 = vunpack.c.l.b16 %v73
    %v94 = vunpack.c.l.b16 %v74
    %v95 = vunpack.c.l.b16 %v75
    %v96 = vunpack.c.l.b16 %v76
    %v97 = vunpack.c.l.b16 %v77
    %v98 = vunpack.c.l.b16 %v78
    %v99 = vunpack.c.l.b16 %v79
    %v100 = vpack.c.b16 %v93, %v92
    %v101 = vpack.c.b16 %v95, %v94
    %v102 = vpack.c.b16 %v97, %v96
    %v103 = vpack.c.b16 %v99, %v98
    %vm108 = vcmask 523264
    %v110 = vsel %vm108, %v64, 0
    %v113 = vsel %vm108, %v65, 0
    %v116 = vsel %vm108, %v66, 0
    %v119 = vsel %vm108, %v67, 0
    %v122 = vsel %vm108, %v68, 0
    %v125 = vsel %vm108, %v69, 0
    %v128 = vsel %vm108, %v70, 0
    %v131 = vsel %vm108, %v71, 0
    %133 = vmatprep.subr.bf16.mxu0 0
    %134 = vmatpush1.bf16.msra.mxu0 %v100
    %135 = vmatprep.subr.bf16.mxu0 0
    %136 = vmatpush1.bf16.msra.mxu0 %v101
    %137 = vmatprep.subr.bf16.mxu0 0
    %138 = vmatpush1.bf16.msra.mxu0 %v102
    %139 = vmatprep.subr.bf16.mxu0 0
    %140 = vmatpush1.bf16.msra.mxu0 %v103
    %141 = vmatprep.subr.bf16.mxu0 0
    %142 = vmatpush1.bf16.msra.mxu0 0
    %143 = vmatprep.subr.bf16.mxu0 0
    %144 = vmatpush1.bf16.msra.mxu0 0
    %145 = vmatprep.subr.bf16.mxu0 0
    %146 = vmatpush1.bf16.msra.mxu0 0
    %147 = vmatprep.subr.bf16.mxu0 0
    %148 = vmatpush1.bf16.msra.mxu0 0
    %149 = vmatprep.subr.bf16.mxu0 0
    %150 = vmatpush1.bf16.msra.mxu0 0
    %151 = vmatprep.subr.bf16.mxu0 0
    %152 = vmatpush1.bf16.msra.mxu0 0
    %153 = vmatprep.subr.bf16.mxu0 0
    %154 = vmatpush1.bf16.msra.mxu0 0
    %155 = vmatprep.subr.bf16.mxu0 0
    %156 = vmatpush1.bf16.msra.mxu0 0
    %157 = vmatprep.subr.bf16.mxu0 0
    %158 = vmatpush1.bf16.msra.mxu0 0
    %159 = vmatprep.subr.bf16.mxu0 0
    %160 = vmatpush1.bf16.msra.mxu0 0
    %161 = vmatprep.subr.bf16.mxu0 0
    %162 = vmatpush1.bf16.msra.mxu0 0
    %163 = vmatprep.subr.bf16.mxu0 0
    %164 = vmatpush1.bf16.msra.mxu0 0
    %165 = vmatprep.mubr.bf16.mxu0 0
    %166 = vmatmul.mubr.bf16.gmra.mrb[0].mxu0 %v110
    %v167 = vpop.f32.mrb[0].mxu0
    %v168 = vadd.f32 %v83, %v167
    %v169 = vpop.f32.mrb[0].mxu0
    %v170 = vpop.f32.mrb[0].mxu0
    %v171 = vadd.f32 %v83, %v170
    %v172 = vpop.f32.mrb[0].mxu0
    %173 = vmatprep.mubr.bf16.mxu0 0
    %174 = vmatmul.mubr.bf16.gmra.mrb[0].mxu0 %v113
    %v175 = vpop.f32.mrb[0].mxu0
    %v176 = vadd.f32 %v83, %v175
    %v177 = vpop.f32.mrb[0].mxu0
    %v178 = vpop.f32.mrb[0].mxu0
    %v179 = vadd.f32 %v83, %v178
    %v180 = vpop.f32.mrb[0].mxu0
    %181 = vmatprep.mubr.bf16.mxu0 0
    %182 = vmatmul.mubr.bf16.gmra.mrb[0].mxu0 %v116
    %v183 = vpop.f32.mrb[0].mxu0
    %v184 = vadd.f32 %v83, %v183
    %v185 = vpop.f32.mrb[0].mxu0
    %v186 = vpop.f32.mrb[0].mxu0
    %v187 = vadd.f32 %v83, %v186
    %v188 = vpop.f32.mrb[0].mxu0
    %189 = vmatprep.mubr.bf16.mxu0 0
    %190 = vmatmul.mubr.bf16.gmra.mrb[0].mxu0 %v119
    %v191 = vpop.f32.mrb[0].mxu0
    %v192 = vadd.f32 %v83, %v191
    %v193 = vpop.f32.mrb[0].mxu0
    %v194 = vpop.f32.mrb[0].mxu0
    %v195 = vadd.f32 %v83, %v194
    %v196 = vpop.f32.mrb[0].mxu0
    %197 = vmatprep.mubr.bf16.mxu0 0
    %198 = vmatmul.mubr.bf16.gmra.mrb[0].mxu0 %v122
    %v199 = vpop.f32.mrb[0].mxu0
    %v200 = vadd.f32 %v83, %v199
    %v201 = vpop.f32.mrb[0].mxu0
    %v202 = vpop.f32.mrb[0].mxu0
    %v203 = vadd.f32 %v83, %v202
    %v204 = vpop.f32.mrb[0].mxu0
    %205 = vmatprep.mubr.bf16.mxu0 0
    %206 = vmatmul.mubr.bf16.gmra.mrb[0].mxu0 %v125
    %v207 = vpop.f32.mrb[0].mxu0
    %v208 = vadd.f32 %v83, %v207
    %v209 = vpop.f32.mrb[0].mxu0
    %v210 = vpop.f32.mrb[0].mxu0
    %v211 = vadd.f32 %v83, %v210
    %v212 = vpop.f32.mrb[0].mxu0
    %213 = vmatprep.mubr.bf16.mxu0 0
    %214 = vmatmul.mubr.bf16.gmra.mrb[0].mxu0 %v128
    %v215 = vpop.f32.mrb[0].mxu0
    %v216 = vadd.f32 %v83, %v215
    %v217 = vpop.f32.mrb[0].mxu0
    %v218 = vpop.f32.mrb[0].mxu0
    %v219 = vadd.f32 %v83, %v218
    %v220 = vpop.f32.mrb[0].mxu0
    %221 = vmatprep.mubr.bf16.mxu0 0
    %222 = vmatmul.mubr.bf16.gmra.mrb[0].mxu0 %v131
    %v223 = vpop.f32.mrb[0].mxu0
    %v224 = vadd.f32 %v83, %v223
    %v225 = vpop.f32.mrb[0].mxu0
    %v226 = vpop.f32.mrb[0].mxu0
    %v227 = vadd.f32 %v83, %v226
    %v228 = vpop.f32.mrb[0].mxu0
    %229 = vdwg.mxu0
    %v230 = vadd.f32 %v168, %v171
    %v231 = vadd.f32 %v230, %v176
    %v232 = vadd.f32 %v231, %v179
    %v233 = vadd.f32 %v232, %v184
    %v234 = vadd.f32 %v233, %v187
    %v235 = vadd.f32 %v234, %v192
    %v236 = vadd.f32 %v235, %v195
    %v237 = vadd.f32 %v236, %v200
    %v238 = vadd.f32 %v237, %v203
    %v239 = vadd.f32 %v238, %v208
    %v240 = vadd.f32 %v239, %v211
    %v241 = vadd.f32 %v240, %v216
    %v242 = vadd.f32 %v241, %v219
    %v243 = vadd.f32 %v242, %v224
    %v244 = vadd.f32 %v243, %v227
    %v245 = vrot.slane %v244, 4
    %v246 = vadd.f32 %v244, %v245
    %v247 = vrot.slane %v246, 2
    %v248 = vadd.f32 %v246, %v247
    %v249 = vrot.slane %v248, 1
    %v250 = vadd.f32 %v248, %v249
    %v251 = vrcp.pop 128.0
    %v252 = vmul.f32 %v250, %v251
    %v253 = vsub.f32 %v168, %v252
    %v254 = vsub.f32 %v171, %v252
    %v255 = vsub.f32 %v176, %v252
    %v256 = vsub.f32 %v179, %v252
    %v257 = vsub.f32 %v184, %v252
    %v258 = vsub.f32 %v187, %v252
    %v259 = vsub.f32 %v192, %v252
    %v260 = vsub.f32 %v195, %v252
    %v261 = vsub.f32 %v200, %v252
    %v262 = vsub.f32 %v203, %v252
    %v263 = vsub.f32 %v208, %v252
    %v264 = vsub.f32 %v211, %v252
    %v265 = vsub.f32 %v216, %v252
    %v266 = vsub.f32 %v219, %v252
    %v267 = vsub.f32 %v224, %v252
    %v268 = vsub.f32 %v227, %v252
    %v269 = vmul.f32 %v253, %v253
    %v270 = vmul.f32 %v254, %v254
    %v271 = vmul.f32 %v255, %v255
    %v272 = vmul.f32 %v256, %v256
    %v273 = vmul.f32 %v257, %v257
    %v274 = vmul.f32 %v258, %v258
    %v275 = vmul.f32 %v259, %v259
    %v276 = vmul.f32 %v260, %v260
    %v277 = vmul.f32 %v261, %v261
    %v278 = vmul.f32 %v262, %v262
    %v279 = vmul.f32 %v263, %v263
    %v280 = vmul.f32 %v264, %v264
    %v281 = vmul.f32 %v265, %v265
    %v282 = vmul.f32 %v266, %v266
    %v283 = vmul.f32 %v267, %v267
    %v284 = vmul.f32 %v268, %v268
    %v285 = vadd.f32 %v269, %v270
    %v286 = vadd.f32 %v285, %v271
    %v287 = vadd.f32 %v286, %v272
    %v288 = vadd.f32 %v287, %v273
    %v289 = vadd.f32 %v288, %v274
    %v290 = vadd.f32 %v289, %v275
    %v291 = vadd.f32 %v290, %v276
    %v292 = vadd.f32 %v291, %v277
    %v293 = vadd.f32 %v292, %v278
    %v294 = vadd.f32 %v293, %v279
    %v295 = vadd.f32 %v294, %v280
    %v296 = vadd.f32 %v295, %v281
    %v297 = vadd.f32 %v296, %v282
    %v298 = vadd.f32 %v297, %v283
    %v299 = vadd.f32 %v298, %v284
    %v300 = vrot.slane %v299, 4
    %v301 = vadd.f32 %v299, %v300
    %v302 = vrot.slane %v301, 2
    %v303 = vadd.f32 %v301, %v302
    %v304 = vrot.slane %v303, 1
    %v305 = vadd.f32 %v303, %v304
    %v306 = vmul.f32 %v305, %v251
    %v307 = vadd.f32 %v306, 1e-05
    %v308 = vrsqrt.pop %v307
    %v309 = vmul.f32 %v253, %v308
    %v310 = vmul.f32 %v254, %v308
    %v311 = vmul.f32 %v255, %v308
    %v312 = vmul.f32 %v256, %v308
    %v313 = vmul.f32 %v257, %v308
    %v314 = vmul.f32 %v258, %v308
    %v315 = vmul.f32 %v259, %v308
    %v316 = vmul.f32 %v260, %v308
    %v317 = vmul.f32 %v261, %v308
    %v318 = vmul.f32 %v262, %v308
    %v319 = vmul.f32 %v263, %v308
    %v320 = vmul.f32 %v264, %v308
    %v321 = vmul.f32 %v265, %v308
    %v322 = vmul.f32 %v266, %v308
    %v323 = vmul.f32 %v267, %v308
    %v324 = vmul.f32 %v268, %v308
    %v325 = vlaneseq
    %v326 = vshrl.u32 %v325, 7
    %v327 = vsub.s32 1, %v326
    %v328 = vrot.slane %v63, %v327
    %v329 = vmul.f32 %v309, %v328
    %v330 = vmul.f32 %v310, %v328
    %v331 = vmul.f32 %v311, %v328
    %v332 = vmul.f32 %v312, %v328
    %v333 = vmul.f32 %v313, %v328
    %v334 = vmul.f32 %v314, %v328
    %v335 = vmul.f32 %v315, %v328
    %v336 = vmul.f32 %v316, %v328
    %v337 = vmul.f32 %v317, %v328
    %v338 = vmul.f32 %v318, %v328
    %v339 = vmul.f32 %v319, %v328
    %v340 = vmul.f32 %v320, %v328
    %v341 = vmul.f32 %v321, %v328
    %v342 = vmul.f32 %v322, %v328
    %v343 = vmul.f32 %v323, %v328
    %v344 = vmul.f32 %v324, %v328
    %v345 = vlaneseq
    %v346 = vshrl.u32 %v345, 7
    %v347 = vsub.s32 2, %v346
    %v348 = vrot.slane %v63, %v347
    %v349 = vadd.f32 %v329, %v348
    %v350 = vadd.f32 %v330, %v348
    %v351 = vadd.f32 %v331, %v348
    %v352 = vadd.f32 %v332, %v348
    %v353 = vadd.f32 %v333, %v348
    %v354 = vadd.f32 %v334, %v348
    %v355 = vadd.f32 %v335, %v348
    %v356 = vadd.f32 %v336, %v348
    %v357 = vadd.f32 %v337, %v348
    %v358 = vadd.f32 %v338, %v348
    %v359 = vadd.f32 %v339, %v348
    %v360 = vadd.f32 %v340, %v348
    %v361 = vadd.f32 %v341, %v348
    %v362 = vadd.f32 %v342, %v348
    %v363 = vadd.f32 %v343, %v348
    %v364 = vadd.f32 %v344, %v348
    %v365 = vmax.f32 %v349, 0.0
    %v366 = vmax.f32 %v350, 0.0
    %v367 = vmax.f32 %v351, 0.0
    %v368 = vmax.f32 %v352, 0.0
    %v369 = vmax.f32 %v353, 0.0
    %v370 = vmax.f32 %v354, 0.0
    %v371 = vmax.f32 %v355, 0.0
    %v372 = vmax.f32 %v356, 0.0
    %v373 = vmax.f32 %v357, 0.0
    %v374 = vmax.f32 %v358, 0.0
    %v375 = vmax.f32 %v359, 0.0
    %v376 = vmax.f32 %v360, 0.0
    %v377 = vmax.f32 %v361, 0.0
    %v378 = vmax.f32 %v362, 0.0
    %v379 = vmax.f32 %v363, 0.0
    %v380 = vmax.f32 %v364, 0.0
    %v381 = vld [vmem:[%s4] sm:$0x1]
    %v382 = vpack.c.bf16 %v366, %v365
    %v383 = vpack.c.bf16 %v368, %v367
    %v384 = vpack.c.bf16 %v370, %v369
    %v385 = vpack.c.bf16 %v372, %v371
    %v386 = vpack.c.bf16 %v374, %v373
    %v387 = vpack.c.bf16 %v376, %v375
    %v388 = vpack.c.bf16 %v378, %v377
    %v389 = vpack.c.bf16 %v380, %v379
    %v390 = vld [vmem:[%s3] sm:$0xf]
    %v391 = vld [vmem:[%s3 + $0x4] sm:$0xf]
    %v392 = vld [vmem:[%s3 + $0x8] sm:$0xf]
    %v393 = vld [vmem:[%s3 + $0xc] sm:$0xf]
    %v394 = vld [vmem:[%s3 + $0x10] sm:$0xf]
    %v395 = vld [vmem:[%s3 + $0x14] sm:$0xf]
    %v396 = vld [vmem:[%s3 + $0x18] sm:$0xf]
    %v397 = vld [vmem:[%s3 + $0x1c] sm:$0xf]
    %v398 = vld [vmem:[%s3 + $0x20] sm:$0xf]
    %v399 = vld [vmem:[%s3 + $0x24] sm:$0xf]
    %v400 = vld [vmem:[%s3 + $0x28] sm:$0xf]
    %v401 = vld [vmem:[%s3 + $0x2c] sm:$0xf]
    %v402 = vld [vmem:[%s3 + $0x30] sm:$0xf]
    %v403 = vld [vmem:[%s3 + $0x34] sm:$0xf]
    %v404 = vld [vmem:[%s3 + $0x38] sm:$0xf]
    %v405 = vld [vmem:[%s3 + $0x3c] sm:$0xf]
    %v407 = vlaneseq
    %v408 = vshrl.u32 %v407, 7
    %v409 = vsub.s32 0, %v408
    %v410 = vrot.slane %v381, %v409
    %v428 = vunpack.c.l.b16 %v390
    %v429 = vunpack.c.l.b16 %v391
    %v430 = vunpack.c.l.b16 %v392
    %v431 = vunpack.c.l.b16 %v393
    %v432 = vunpack.c.l.b16 %v394
    %v433 = vunpack.c.l.b16 %v395
    %v434 = vunpack.c.l.b16 %v396
    %v435 = vunpack.c.l.b16 %v397
    %v436 = vunpack.c.l.b16 %v398
    %v437 = vunpack.c.l.b16 %v399
    %v438 = vunpack.c.l.b16 %v400
    %v439 = vunpack.c.l.b16 %v401
    %v440 = vunpack.c.l.b16 %v402
    %v441 = vunpack.c.l.b16 %v403
    %v442 = vunpack.c.l.b16 %v404
    %v443 = vunpack.c.l.b16 %v405
    %v444 = vpack.c.b16 %v429, %v428
    %v445 = vpack.c.b16 %v431, %v430
    %v446 = vpack.c.b16 %v433, %v432
    %v447 = vpack.c.b16 %v435, %v434
    %v448 = vpack.c.b16 %v437, %v436
    %v449 = vpack.c.b16 %v439, %v438
    %v450 = vpack.c.b16 %v441, %v440
    %v451 = vpack.c.b16 %v443, %v442
    %460 = vmatprep.subr.bf16.mxu0 0
    %461 = vmatpush1.bf16.msra.mxu0 %v444
    %462 = vmatprep.subr.bf16.mxu0 0
    %463 = vmatpush1.bf16.msra.mxu0 %v445
    %464 = vmatprep.subr.bf16.mxu0 0
    %465 = vmatpush1.bf16.msra.mxu0 %v446
    %466 = vmatprep.subr.bf16.mxu0 0
    %467 = vmatpush1.bf16.msra.mxu0 %v447
    %468 = vmatprep.subr.bf16.mxu0 0
    %469 = vmatpush1.bf16.msra.mxu0 %v448
    %470 = vmatprep.subr.bf16.mxu0 0
    %471 = vmatpush1.bf16.msra.mxu0 %v449
    %472 = vmatprep.subr.bf16.mxu0 0
    %473 = vmatpush1.bf16.msra.mxu0 %v450
    %474 = vmatprep.subr.bf16.mxu0 0
    %475 = vmatpush1.bf16.msra.mxu0 %v451
    %476 = vmatprep.subr.bf16.mxu0 0
    %477 = vmatpush1.bf16.msra.mxu0 0
    %478 = vmatprep.subr.bf16.mxu0 0
    %479 = vmatpush1.bf16.msra.mxu0 0
    %480 = vmatprep.subr.bf16.mxu0 0
    %481 = vmatpush1.bf16.msra.mxu0 0
    %482 = vmatprep.subr.bf16.mxu0 0
    %483 = vmatpush1.bf16.msra.mxu0 0
    %484 = vmatprep.subr.bf16.mxu0 0
    %485 = vmatpush1.bf16.msra.mxu0 0
    %486 = vmatprep.subr.bf16.mxu0 0
    %487 = vmatpush1.bf16.msra.mxu0 0
    %488 = vmatprep.subr.bf16.mxu0 0
    %489 = vmatpush1.bf16.msra.mxu0 0
    %490 = vmatprep.subr.bf16.mxu0 0
    %491 = vmatpush1.bf16.msra.mxu0 0
    %492 = vmatprep.mubr.bf16.mxu0 0
    %493 = vmatmul.mubr.bf16.gmra.mrb[0].mxu0 %v382
    %v494 = vpop.f32.mrb[0].mxu0
    %v495 = vadd.f32 %v410, %v494
    %v496 = vpop.f32.mrb[0].mxu0
    %v497 = vpop.f32.mrb[0].mxu0
    %v498 = vadd.f32 %v410, %v497
    %v499 = vpop.f32.mrb[0].mxu0
    %500 = vmatprep.mubr.bf16.mxu0 0
    %501 = vmatmul.mubr.bf16.gmra.mrb[0].mxu0 %v383
    %v502 = vpop.f32.mrb[0].mxu0
    %v503 = vadd.f32 %v410, %v502
    %v504 = vpop.f32.mrb[0].mxu0
    %v505 = vpop.f32.mrb[0].mxu0
    %v506 = vadd.f32 %v410, %v505
    %v507 = vpop.f32.mrb[0].mxu0
    %508 = vmatprep.mubr.bf16.mxu0 0
    %509 = vmatmul.mubr.bf16.gmra.mrb[0].mxu0 %v384
    %v510 = vpop.f32.mrb[0].mxu0
    %v511 = vadd.f32 %v410, %v510
    %v512 = vpop.f32.mrb[0].mxu0
    %v513 = vpop.f32.mrb[0].mxu0
    %v514 = vadd.f32 %v410, %v513
    %v515 = vpop.f32.mrb[0].mxu0
    %516 = vmatprep.mubr.bf16.mxu0 0
    %517 = vmatmul.mubr.bf16.gmra.mrb[0].mxu0 %v385
    %v518 = vpop.f32.mrb[0].mxu0
    %v519 = vadd.f32 %v410, %v518
    %v520 = vpop.f32.mrb[0].mxu0
    %v521 = vpop.f32.mrb[0].mxu0
    %v522 = vadd.f32 %v410, %v521
    %v523 = vpop.f32.mrb[0].mxu0
    %524 = vmatprep.mubr.bf16.mxu0 0
    %525 = vmatmul.mubr.bf16.gmra.mrb[0].mxu0 %v386
    %v526 = vpop.f32.mrb[0].mxu0
    %v527 = vadd.f32 %v410, %v526
    %v528 = vpop.f32.mrb[0].mxu0
    %v529 = vpop.f32.mrb[0].mxu0
    %v530 = vadd.f32 %v410, %v529
    %v531 = vpop.f32.mrb[0].mxu0
    %532 = vmatprep.mubr.bf16.mxu0 0
    %533 = vmatmul.mubr.bf16.gmra.mrb[0].mxu0 %v387
    %v534 = vpop.f32.mrb[0].mxu0
    %v535 = vadd.f32 %v410, %v534
    %v536 = vpop.f32.mrb[0].mxu0
    %v537 = vpop.f32.mrb[0].mxu0
    %v538 = vadd.f32 %v410, %v537
    %v539 = vpop.f32.mrb[0].mxu0
    %540 = vmatprep.mubr.bf16.mxu0 0
    %541 = vmatmul.mubr.bf16.gmra.mrb[0].mxu0 %v388
    %v542 = vpop.f32.mrb[0].mxu0
    %v543 = vadd.f32 %v410, %v542
    %v544 = vpop.f32.mrb[0].mxu0
    %v545 = vpop.f32.mrb[0].mxu0
    %v546 = vadd.f32 %v410, %v545
    %v547 = vpop.f32.mrb[0].mxu0
    %548 = vmatprep.mubr.bf16.mxu0 0
    %549 = vmatmul.mubr.bf16.gmra.mrb[0].mxu0 %v389
    %v550 = vpop.f32.mrb[0].mxu0
    %v551 = vadd.f32 %v410, %v550
    %v552 = vpop.f32.mrb[0].mxu0
    %v553 = vpop.f32.mrb[0].mxu0
    %v554 = vadd.f32 %v410, %v553
    %v555 = vpop.f32.mrb[0].mxu0
    %556 = vdwg.mxu0
    %v557 = vld [vmem:[%s6] sm:$0x7]
    %v558 = vpack.c.bf16 %v498, %v495
    %v559 = vpack.c.bf16 %v506, %v503
    %v560 = vpack.c.bf16 %v514, %v511
    %v561 = vpack.c.bf16 %v522, %v519
    %v562 = vpack.c.bf16 %v530, %v527
    %v563 = vpack.c.bf16 %v538, %v535
    %v564 = vpack.c.bf16 %v546, %v543
    %v565 = vpack.c.bf16 %v554, %v551
    %v566 = vld [vmem:[%s5] sm:$0xf]
    %v567 = vld [vmem:[%s5 + $0x4] sm:$0xf]
    %v568 = vld [vmem:[%s5 + $0x8] sm:$0xf]
    %v569 = vld [vmem:[%s5 + $0xc] sm:$0xf]
    %v570 = vld [vmem:[%s5 + $0x10] sm:$0xf]
    %v571 = vld [vmem:[%s5 + $0x14] sm:$0xf]
    %v572 = vld [vmem:[%s5 + $0x18] sm:$0xf]
    %v573 = vld [vmem:[%s5 + $0x1c] sm:$0xf]
    %v574 = vld [vmem:[%s5 + $0x20] sm:$0xf]
    %v575 = vld [vmem:[%s5 + $0x24] sm:$0xf]
    %v576 = vld [vmem:[%s5 + $0x28] sm:$0xf]
    %v577 = vld [vmem:[%s5 + $0x2c] sm:$0xf]
    %v578 = vld [vmem:[%s5 + $0x30] sm:$0xf]
    %v579 = vld [vmem:[%s5 + $0x34] sm:$0xf]
    %v580 = vld [vmem:[%s5 + $0x38] sm:$0xf]
    %v581 = vld [vmem:[%s5 + $0x3c] sm:$0xf]
    %v582 = vlaneseq
    %v583 = vshrl.u32 %v582, 7
    %v584 = vsub.s32 0, %v583
    %v585 = vrot.slane %v557, %v584
    %v602 = vunpack.c.l.b16 %v566
    %v603 = vunpack.c.l.b16 %v567
    %v604 = vunpack.c.l.b16 %v568
    %v605 = vunpack.c.l.b16 %v569
    %v606 = vunpack.c.l.b16 %v570
    %v607 = vunpack.c.l.b16 %v571
    %v608 = vunpack.c.l.b16 %v572
    %v609 = vunpack.c.l.b16 %v573
    %v610 = vunpack.c.l.b16 %v574
    %v611 = vunpack.c.l.b16 %v575
    %v612 = vunpack.c.l.b16 %v576
    %v613 = vunpack.c.l.b16 %v577
    %v614 = vunpack.c.l.b16 %v578
    %v615 = vunpack.c.l.b16 %v579
    %v616 = vunpack.c.l.b16 %v580
    %v617 = vunpack.c.l.b16 %v581
    %v618 = vpack.c.b16 %v603, %v602
    %v619 = vpack.c.b16 %v605, %v604
    %v620 = vpack.c.b16 %v607, %v606
    %v621 = vpack.c.b16 %v609, %v608
    %v622 = vpack.c.b16 %v611, %v610
    %v623 = vpack.c.b16 %v613, %v612
    %v624 = vpack.c.b16 %v615, %v614
    %v625 = vpack.c.b16 %v617, %v616
    %634 = vmatprep.subr.bf16.mxu0 0
    %635 = vmatpush1.bf16.msra.mxu0 %v618
    %636 = vmatprep.subr.bf16.mxu0 0
    %637 = vmatpush1.bf16.msra.mxu0 %v619
    %638 = vmatprep.subr.bf16.mxu0 0
    %639 = vmatpush1.bf16.msra.mxu0 %v620
    %640 = vmatprep.subr.bf16.mxu0 0
    %641 = vmatpush1.bf16.msra.mxu0 %v621
    %642 = vmatprep.subr.bf16.mxu0 0
    %643 = vmatpush1.bf16.msra.mxu0 %v622
    %644 = vmatprep.subr.bf16.mxu0 0
    %645 = vmatpush1.bf16.msra.mxu0 %v623
    %646 = vmatprep.subr.bf16.mxu0 0
    %647 = vmatpush1.bf16.msra.mxu0 %v624
    %648 = vmatprep.subr.bf16.mxu0 0
    %649 = vmatpush1.bf16.msra.mxu0 %v625
    %650 = vmatprep.subr.bf16.mxu0 0
    %651 = vmatpush1.bf16.msra.mxu0 0
    %652 = vmatprep.subr.bf16.mxu0 0
    %653 = vmatpush1.bf16.msra.mxu0 0
    %654 = vmatprep.subr.bf16.mxu0 0
    %655 = vmatpush1.bf16.msra.mxu0 0
    %656 = vmatprep.subr.bf16.mxu0 0
    %657 = vmatpush1.bf16.msra.mxu0 0
    %658 = vmatprep.subr.bf16.mxu0 0
    %659 = vmatpush1.bf16.msra.mxu0 0
    %660 = vmatprep.subr.bf16.mxu0 0
    %661 = vmatpush1.bf16.msra.mxu0 0
    %662 = vmatprep.subr.bf16.mxu0 0
    %663 = vmatpush1.bf16.msra.mxu0 0
    %664 = vmatprep.subr.bf16.mxu0 0
    %665 = vmatpush1.bf16.msra.mxu0 0
    %666 = vmatprep.mubr.bf16.mxu0 0
    %667 = vmatmul.mubr.bf16.gmra.mrb[0].mxu0 %v558
    %v668 = vpop.f32.mrb[0].mxu0
    %v669 = vadd.f32 %v585, %v668
    %v670 = vpop.f32.mrb[0].mxu0
    %v671 = vpop.f32.mrb[0].mxu0
    %v672 = vadd.f32 %v585, %v671
    %v673 = vpop.f32.mrb[0].mxu0
    %674 = vmatprep.mubr.bf16.mxu0 0
    %675 = vmatmul.mubr.bf16.gmra.mrb[0].mxu0 %v559
    %v676 = vpop.f32.mrb[0].mxu0
    %v677 = vadd.f32 %v585, %v676
    %v678 = vpop.f32.mrb[0].mxu0
    %v679 = vpop.f32.mrb[0].mxu0
    %v680 = vadd.f32 %v585, %v679
    %v681 = vpop.f32.mrb[0].mxu0
    %682 = vmatprep.mubr.bf16.mxu0 0
    %683 = vmatmul.mubr.bf16.gmra.mrb[0].mxu0 %v560
    %v684 = vpop.f32.mrb[0].mxu0
    %v685 = vadd.f32 %v585, %v684
    %v686 = vpop.f32.mrb[0].mxu0
    %v687 = vpop.f32.mrb[0].mxu0
    %v688 = vadd.f32 %v585, %v687
    %v689 = vpop.f32.mrb[0].mxu0
    %690 = vmatprep.mubr.bf16.mxu0 0
    %691 = vmatmul.mubr.bf16.gmra.mrb[0].mxu0 %v561
    %v692 = vpop.f32.mrb[0].mxu0
    %v693 = vadd.f32 %v585, %v692
    %v694 = vpop.f32.mrb[0].mxu0
    %v695 = vpop.f32.mrb[0].mxu0
    %v696 = vadd.f32 %v585, %v695
    %v697 = vpop.f32.mrb[0].mxu0
    %698 = vmatprep.mubr.bf16.mxu0 0
    %699 = vmatmul.mubr.bf16.gmra.mrb[0].mxu0 %v562
    %v700 = vpop.f32.mrb[0].mxu0
    %v701 = vadd.f32 %v585, %v700
    %v702 = vpop.f32.mrb[0].mxu0
    %v703 = vpop.f32.mrb[0].mxu0
    %v704 = vadd.f32 %v585, %v703
    %v705 = vpop.f32.mrb[0].mxu0
    %706 = vmatprep.mubr.bf16.mxu0 0
    %707 = vmatmul.mubr.bf16.gmra.mrb[0].mxu0 %v563
    %v708 = vpop.f32.mrb[0].mxu0
    %v709 = vadd.f32 %v585, %v708
    %v710 = vpop.f32.mrb[0].mxu0
    %v711 = vpop.f32.mrb[0].mxu0
    %v712 = vadd.f32 %v585, %v711
    %v713 = vpop.f32.mrb[0].mxu0
    %714 = vmatprep.mubr.bf16.mxu0 0
    %715 = vmatmul.mubr.bf16.gmra.mrb[0].mxu0 %v564
    %v716 = vpop.f32.mrb[0].mxu0
    %v717 = vadd.f32 %v585, %v716
    %v718 = vpop.f32.mrb[0].mxu0
    %v719 = vpop.f32.mrb[0].mxu0
    %v720 = vadd.f32 %v585, %v719
    %v721 = vpop.f32.mrb[0].mxu0
    %722 = vmatprep.mubr.bf16.mxu0 0
    %723 = vmatmul.mubr.bf16.gmra.mrb[0].mxu0 %v565
    %v724 = vpop.f32.mrb[0].mxu0
    %v725 = vadd.f32 %v585, %v724
    %v726 = vpop.f32.mrb[0].mxu0
    %v727 = vpop.f32.mrb[0].mxu0
    %v728 = vadd.f32 %v585, %v727
    %v729 = vpop.f32.mrb[0].mxu0
    %730 = vdwg.mxu0
    %v731 = vadd.f32 %v669, %v672
    %v732 = vadd.f32 %v731, %v677
    %v733 = vadd.f32 %v732, %v680
    %v734 = vadd.f32 %v733, %v685
    %v735 = vadd.f32 %v734, %v688
    %v736 = vadd.f32 %v735, %v693
    %v737 = vadd.f32 %v736, %v696
    %v738 = vadd.f32 %v737, %v701
    %v739 = vadd.f32 %v738, %v704
    %v740 = vadd.f32 %v739, %v709
    %v741 = vadd.f32 %v740, %v712
    %v742 = vadd.f32 %v741, %v717
    %v743 = vadd.f32 %v742, %v720
    %v744 = vadd.f32 %v743, %v725
    %v745 = vadd.f32 %v744, %v728
    %v746 = vrot.slane %v745, 4
    %v747 = vadd.f32 %v745, %v746
    %v748 = vrot.slane %v747, 2
    %v749 = vadd.f32 %v747, %v748
    %v750 = vrot.slane %v749, 1
    %v751 = vadd.f32 %v749, %v750
    %v752 = vmul.f32 %v751, %v251
    %v753 = vsub.f32 %v669, %v752
    %v754 = vsub.f32 %v672, %v752
    %v755 = vsub.f32 %v677, %v752
    %v756 = vsub.f32 %v680, %v752
    %v757 = vsub.f32 %v685, %v752
    %v758 = vsub.f32 %v688, %v752
    %v759 = vsub.f32 %v693, %v752
    %v760 = vsub.f32 %v696, %v752
    %v761 = vsub.f32 %v701, %v752
    %v762 = vsub.f32 %v704, %v752
    %v763 = vsub.f32 %v709, %v752
    %v764 = vsub.f32 %v712, %v752
    %v765 = vsub.f32 %v717, %v752
    %v766 = vsub.f32 %v720, %v752
    %v767 = vsub.f32 %v725, %v752
    %v768 = vsub.f32 %v728, %v752
    %v769 = vmul.f32 %v753, %v753
    %v770 = vmul.f32 %v754, %v754
    %v771 = vmul.f32 %v755, %v755
    %v772 = vmul.f32 %v756, %v756
    %v773 = vmul.f32 %v757, %v757
    %v774 = vmul.f32 %v758, %v758
    %v775 = vmul.f32 %v759, %v759
    %v776 = vmul.f32 %v760, %v760
    %v777 = vmul.f32 %v761, %v761
    %v778 = vmul.f32 %v762, %v762
    %v779 = vmul.f32 %v763, %v763
    %v780 = vmul.f32 %v764, %v764
    %v781 = vmul.f32 %v765, %v765
    %v782 = vmul.f32 %v766, %v766
    %v783 = vmul.f32 %v767, %v767
    %v784 = vmul.f32 %v768, %v768
    %v785 = vadd.f32 %v769, %v770
    %v786 = vadd.f32 %v785, %v771
    %v787 = vadd.f32 %v786, %v772
    %v788 = vadd.f32 %v787, %v773
    %v789 = vadd.f32 %v788, %v774
    %v790 = vadd.f32 %v789, %v775
    %v791 = vadd.f32 %v790, %v776
    %v792 = vadd.f32 %v791, %v777
    %v793 = vadd.f32 %v792, %v778
    %v794 = vadd.f32 %v793, %v779
    %v795 = vadd.f32 %v794, %v780
    %v796 = vadd.f32 %v795, %v781
    %v797 = vadd.f32 %v796, %v782
    %v798 = vadd.f32 %v797, %v783
    %v799 = vadd.f32 %v798, %v784
    %v800 = vrot.slane %v799, 4
    %v801 = vadd.f32 %v799, %v800
    %v802 = vrot.slane %v801, 2
    %v803 = vadd.f32 %v801, %v802
    %v804 = vrot.slane %v803, 1
    %v805 = vadd.f32 %v803, %v804
    %v806 = vmul.f32 %v805, %v251
    %v807 = vadd.f32 %v806, 1e-05
    %v808 = vrsqrt.pop %v807
    %v809 = vmul.f32 %v753, %v808
    %v810 = vmul.f32 %v754, %v808
    %v811 = vmul.f32 %v755, %v808
    %v812 = vmul.f32 %v756, %v808
    %v813 = vmul.f32 %v757, %v808
    %v814 = vmul.f32 %v758, %v808
    %v815 = vmul.f32 %v759, %v808
    %v816 = vmul.f32 %v760, %v808
    %v817 = vmul.f32 %v761, %v808
    %v818 = vmul.f32 %v762, %v808
    %v819 = vmul.f32 %v763, %v808
    %v820 = vmul.f32 %v764, %v808
    %v821 = vmul.f32 %v765, %v808
    %v822 = vmul.f32 %v766, %v808
    %v823 = vmul.f32 %v767, %v808
    %v824 = vmul.f32 %v768, %v808
    %v825 = vlaneseq
    %v826 = vshrl.u32 %v825, 7
    %v827 = vsub.s32 1, %v826
    %v828 = vrot.slane %v557, %v827
    %v829 = vmul.f32 %v809, %v828
    %v830 = vmul.f32 %v810, %v828
    %v831 = vmul.f32 %v811, %v828
    %v832 = vmul.f32 %v812, %v828
    %v833 = vmul.f32 %v813, %v828
    %v834 = vmul.f32 %v814, %v828
    %v835 = vmul.f32 %v815, %v828
    %v836 = vmul.f32 %v816, %v828
    %v837 = vmul.f32 %v817, %v828
    %v838 = vmul.f32 %v818, %v828
    %v839 = vmul.f32 %v819, %v828
    %v840 = vmul.f32 %v820, %v828
    %v841 = vmul.f32 %v821, %v828
    %v842 = vmul.f32 %v822, %v828
    %v843 = vmul.f32 %v823, %v828
    %v844 = vmul.f32 %v824, %v828
    %v845 = vlaneseq
    %v846 = vshrl.u32 %v845, 7
    %v847 = vsub.s32 2, %v846
    %v848 = vrot.slane %v557, %v847
    %v849 = vadd.f32 %v829, %v848
    %v850 = vadd.f32 %v830, %v848
    %v851 = vadd.f32 %v831, %v848
    %v852 = vadd.f32 %v832, %v848
    %v853 = vadd.f32 %v833, %v848
    %v854 = vadd.f32 %v834, %v848
    %v855 = vadd.f32 %v835, %v848
    %v856 = vadd.f32 %v836, %v848
    %v857 = vadd.f32 %v837, %v848
    %v858 = vadd.f32 %v838, %v848
    %v859 = vadd.f32 %v839, %v848
    %v860 = vadd.f32 %v840, %v848
    %v861 = vadd.f32 %v841, %v848
    %v862 = vadd.f32 %v842, %v848
    %v863 = vadd.f32 %v843, %v848
    %v864 = vadd.f32 %v844, %v848
    %v865 = vmax.f32 %v849, 0.0
    %v866 = vmax.f32 %v850, 0.0
    %v867 = vmax.f32 %v851, 0.0
    %v868 = vmax.f32 %v852, 0.0
    %v869 = vmax.f32 %v853, 0.0
    %v870 = vmax.f32 %v854, 0.0
    %v871 = vmax.f32 %v855, 0.0
    %v872 = vmax.f32 %v856, 0.0
    %v873 = vmax.f32 %v857, 0.0
    %v874 = vmax.f32 %v858, 0.0
    %v875 = vmax.f32 %v859, 0.0
    %v876 = vmax.f32 %v860, 0.0
    %v877 = vmax.f32 %v861, 0.0
    %v878 = vmax.f32 %v862, 0.0
    %v879 = vmax.f32 %v863, 0.0
    %v880 = vmax.f32 %v864, 0.0
    %v881 = vld [vmem:[%s8] sm:$0x1]
    %v882 = vpack.c.bf16 %v866, %v865
    %v883 = vpack.c.bf16 %v868, %v867
    %v884 = vpack.c.bf16 %v870, %v869
    %v885 = vpack.c.bf16 %v872, %v871
    %v886 = vpack.c.bf16 %v874, %v873
    %v887 = vpack.c.bf16 %v876, %v875
    %v888 = vpack.c.bf16 %v878, %v877
    %v889 = vpack.c.bf16 %v880, %v879
    %v890 = vld [vmem:[%s7] sm:$0xf]
    %v891 = vld [vmem:[%s7 + $0x4] sm:$0xf]
    %v892 = vld [vmem:[%s7 + $0x8] sm:$0xf]
    %v893 = vld [vmem:[%s7 + $0xc] sm:$0xf]
    %v894 = vld [vmem:[%s7 + $0x10] sm:$0xf]
    %v895 = vld [vmem:[%s7 + $0x14] sm:$0xf]
    %v896 = vld [vmem:[%s7 + $0x18] sm:$0xf]
    %v897 = vld [vmem:[%s7 + $0x1c] sm:$0xf]
    %v898 = vld [vmem:[%s7 + $0x20] sm:$0xf]
    %v899 = vld [vmem:[%s7 + $0x24] sm:$0xf]
    %v900 = vld [vmem:[%s7 + $0x28] sm:$0xf]
    %v901 = vld [vmem:[%s7 + $0x2c] sm:$0xf]
    %v902 = vld [vmem:[%s7 + $0x30] sm:$0xf]
    %v903 = vld [vmem:[%s7 + $0x34] sm:$0xf]
    %v904 = vld [vmem:[%s7 + $0x38] sm:$0xf]
    %v905 = vld [vmem:[%s7 + $0x3c] sm:$0xf]
    %v907 = vlaneseq
    %v908 = vshrl.u32 %v907, 7
    %v909 = vsub.s32 0, %v908
    %v910 = vrot.slane %v881, %v909
    %v928 = vunpack.c.l.b16 %v890
    %v929 = vunpack.c.l.b16 %v891
    %v930 = vunpack.c.l.b16 %v892
    %v931 = vunpack.c.l.b16 %v893
    %v932 = vunpack.c.l.b16 %v894
    %v933 = vunpack.c.l.b16 %v895
    %v934 = vunpack.c.l.b16 %v896
    %v935 = vunpack.c.l.b16 %v897
    %v936 = vunpack.c.l.b16 %v898
    %v937 = vunpack.c.l.b16 %v899
    %v938 = vunpack.c.l.b16 %v900
    %v939 = vunpack.c.l.b16 %v901
    %v940 = vunpack.c.l.b16 %v902
    %v941 = vunpack.c.l.b16 %v903
    %v942 = vunpack.c.l.b16 %v904
    %v943 = vunpack.c.l.b16 %v905
    %v944 = vpack.c.b16 %v929, %v928
    %v945 = vpack.c.b16 %v931, %v930
    %v946 = vpack.c.b16 %v933, %v932
    %v947 = vpack.c.b16 %v935, %v934
    %v948 = vpack.c.b16 %v937, %v936
    %v949 = vpack.c.b16 %v939, %v938
    %v950 = vpack.c.b16 %v941, %v940
    %v951 = vpack.c.b16 %v943, %v942
    %960 = vmatprep.subr.bf16.mxu0 0
    %961 = vmatpush1.bf16.msra.mxu0 %v944
    %962 = vmatprep.subr.bf16.mxu0 0
    %963 = vmatpush1.bf16.msra.mxu0 %v945
    %964 = vmatprep.subr.bf16.mxu0 0
    %965 = vmatpush1.bf16.msra.mxu0 %v946
    %966 = vmatprep.subr.bf16.mxu0 0
    %967 = vmatpush1.bf16.msra.mxu0 %v947
    %968 = vmatprep.subr.bf16.mxu0 0
    %969 = vmatpush1.bf16.msra.mxu0 %v948
    %970 = vmatprep.subr.bf16.mxu0 0
    %971 = vmatpush1.bf16.msra.mxu0 %v949
    %972 = vmatprep.subr.bf16.mxu0 0
    %973 = vmatpush1.bf16.msra.mxu0 %v950
    %974 = vmatprep.subr.bf16.mxu0 0
    %975 = vmatpush1.bf16.msra.mxu0 %v951
    %976 = vmatprep.subr.bf16.mxu0 0
    %977 = vmatpush1.bf16.msra.mxu0 0
    %978 = vmatprep.subr.bf16.mxu0 0
    %979 = vmatpush1.bf16.msra.mxu0 0
    %980 = vmatprep.subr.bf16.mxu0 0
    %981 = vmatpush1.bf16.msra.mxu0 0
    %982 = vmatprep.subr.bf16.mxu0 0
    %983 = vmatpush1.bf16.msra.mxu0 0
    %984 = vmatprep.subr.bf16.mxu0 0
    %985 = vmatpush1.bf16.msra.mxu0 0
    %986 = vmatprep.subr.bf16.mxu0 0
    %987 = vmatpush1.bf16.msra.mxu0 0
    %988 = vmatprep.subr.bf16.mxu0 0
    %989 = vmatpush1.bf16.msra.mxu0 0
    %990 = vmatprep.subr.bf16.mxu0 0
    %991 = vmatpush1.bf16.msra.mxu0 0
    %992 = vmatprep.mubr.bf16.mxu0 0
    %993 = vmatmul.mubr.bf16.gmra.mrb[0].mxu0 %v882
    %v994 = vpop.f32.mrb[0].mxu0
    %v995 = vadd.f32 %v910, %v994
    %v996 = vpop.f32.mrb[0].mxu0
    %v997 = vpop.f32.mrb[0].mxu0
    %v998 = vadd.f32 %v910, %v997
    %v999 = vpop.f32.mrb[0].mxu0
    %1000 = vmatprep.mubr.bf16.mxu0 0
    %1001 = vmatmul.mubr.bf16.gmra.mrb[0].mxu0 %v883
    %v1002 = vpop.f32.mrb[0].mxu0
    %v1003 = vadd.f32 %v910, %v1002
    %v1004 = vpop.f32.mrb[0].mxu0
    %v1005 = vpop.f32.mrb[0].mxu0
    %v1006 = vadd.f32 %v910, %v1005
    %v1007 = vpop.f32.mrb[0].mxu0
    %1008 = vmatprep.mubr.bf16.mxu0 0
    %1009 = vmatmul.mubr.bf16.gmra.mrb[0].mxu0 %v884
    %v1010 = vpop.f32.mrb[0].mxu0
    %v1011 = vadd.f32 %v910, %v1010
    %v1012 = vpop.f32.mrb[0].mxu0
    %v1013 = vpop.f32.mrb[0].mxu0
    %v1014 = vadd.f32 %v910, %v1013
    %v1015 = vpop.f32.mrb[0].mxu0
    %1016 = vmatprep.mubr.bf16.mxu0 0
    %1017 = vmatmul.mubr.bf16.gmra.mrb[0].mxu0 %v885
    %v1018 = vpop.f32.mrb[0].mxu0
    %v1019 = vadd.f32 %v910, %v1018
    %v1020 = vpop.f32.mrb[0].mxu0
    %v1021 = vpop.f32.mrb[0].mxu0
    %v1022 = vadd.f32 %v910, %v1021
    %v1023 = vpop.f32.mrb[0].mxu0
    %1024 = vmatprep.mubr.bf16.mxu0 0
    %1025 = vmatmul.mubr.bf16.gmra.mrb[0].mxu0 %v886
    %v1026 = vpop.f32.mrb[0].mxu0
    %v1027 = vadd.f32 %v910, %v1026
    %v1028 = vpop.f32.mrb[0].mxu0
    %v1029 = vpop.f32.mrb[0].mxu0
    %v1030 = vadd.f32 %v910, %v1029
    %v1031 = vpop.f32.mrb[0].mxu0
    %1032 = vmatprep.mubr.bf16.mxu0 0
    %1033 = vmatmul.mubr.bf16.gmra.mrb[0].mxu0 %v887
    %v1034 = vpop.f32.mrb[0].mxu0
    %v1035 = vadd.f32 %v910, %v1034
    %v1036 = vpop.f32.mrb[0].mxu0
    %v1037 = vpop.f32.mrb[0].mxu0
    %v1038 = vadd.f32 %v910, %v1037
    %v1039 = vpop.f32.mrb[0].mxu0
    %1040 = vmatprep.mubr.bf16.mxu0 0
    %1041 = vmatmul.mubr.bf16.gmra.mrb[0].mxu0 %v888
    %v1042 = vpop.f32.mrb[0].mxu0
    %v1043 = vadd.f32 %v910, %v1042
    %v1044 = vpop.f32.mrb[0].mxu0
    %v1045 = vpop.f32.mrb[0].mxu0
    %v1046 = vadd.f32 %v910, %v1045
    %v1047 = vpop.f32.mrb[0].mxu0
    %1048 = vmatprep.mubr.bf16.mxu0 0
    %1049 = vmatmul.mubr.bf16.gmra.mrb[0].mxu0 %v889
    %v1050 = vpop.f32.mrb[0].mxu0
    %v1051 = vadd.f32 %v910, %v1050
    %v1052 = vpop.f32.mrb[0].mxu0
    %v1053 = vpop.f32.mrb[0].mxu0
    %v1054 = vadd.f32 %v910, %v1053
    %v1055 = vpop.f32.mrb[0].mxu0
    %1056 = vdwg.mxu0
    %v1057 = vtanh.pop %v995
    %v1058 = vtanh.pop %v998
    %v1059 = vtanh.pop %v1003
    %v1060 = vtanh.pop %v1006
    %v1061 = vtanh.pop %v1011
    %v1062 = vtanh.pop %v1014
    %v1063 = vtanh.pop %v1019
    %v1064 = vtanh.pop %v1022
    %v1065 = vtanh.pop %v1027
    %v1066 = vtanh.pop %v1030
    %v1067 = vtanh.pop %v1035
    %v1068 = vtanh.pop %v1038
    %v1069 = vtanh.pop %v1043
    %v1070 = vtanh.pop %v1046
    %v1071 = vtanh.pop %v1051
    %v1072 = vtanh.pop %v1054
    %1073 = vst [vmem:[%s9] sm:$0xff] %v1057
    %1074 = vst [vmem:[%s9 + $0x8] sm:$0xff] %v1058
    %1075 = vst [vmem:[%s9 + $0x10] sm:$0xff] %v1059
    %1076 = vst [vmem:[%s9 + $0x18] sm:$0xff] %v1060
    %1077 = vst [vmem:[%s9 + $0x20] sm:$0xff] %v1061
    %1078 = vst [vmem:[%s9 + $0x28] sm:$0xff] %v1062
    %1079 = vst [vmem:[%s9 + $0x30] sm:$0xff] %v1063
    %1080 = vst [vmem:[%s9 + $0x38] sm:$0xff] %v1064
    %1081 = vst [vmem:[%s9 + $0x40] sm:$0xff] %v1065
    %1082 = vst [vmem:[%s9 + $0x48] sm:$0xff] %v1066
    %1083 = vst [vmem:[%s9 + $0x50] sm:$0xff] %v1067
    %1084 = vst [vmem:[%s9 + $0x58] sm:$0xff] %v1068
    %1085 = vst [vmem:[%s9 + $0x60] sm:$0xff] %v1069
    %1086 = vst [vmem:[%s9 + $0x68] sm:$0xff] %v1070
    %1087 = vst [vmem:[%s9 + $0x70] sm:$0xff] %v1071
    %1088 = vst [vmem:[%s9 + $0x78] sm:$0xff] %v1072
    // Predicated region
    $region42: #{autoencoder_forward.1} parent=1 // pred_check
      _
    $region43: #{autoencoder_forward.1} parent=1 // pred_check_branch
      %1090 = sbr.rel (0) target = $region45
    $region44: #{autoencoder_forward.1} parent=1 // pred_region
      _
    $region45: #{autoencoder_forward.1} parent=1 // pred_fallthru
      _
    // Predicated region
    $region46: #{autoencoder_forward.1} parent=1 // pred_check
      _
    $region47: #{autoencoder_forward.1} parent=1 // pred_check_branch
      %1092 = sbr.rel (0) target = $region49
    $region48: #{autoencoder_forward.1} parent=1 // pred_region
      _
    $region49: #{autoencoder_forward.1} parent=1 // pred_fallthru
      _
    %1093 = vsyncpa [#allocation3], 1

</llo_original>
